<compile_context>
chip_gen: v7x
topology: tpu7x:2x2x1
jax: 0.10.0
libtpu: 0.0.40
codegen_flags: <defaults>
</compile_context>

<pallas_src>
import jax
import jax.numpy as jnp
from jax import lax
from jax.experimental import pallas as pl
from jax.experimental.pallas import tpu as pltpu

N_ROWS = 6        # rows after .view(1, 6, 64)
FEAT = 64         # feature / channel dim
BN_EPS = 1e-5

# contract x's dim 1 with W's dim 1  ==  x @ W^T  (torch Linear layout)
_DN = (((1,), (1,)), ((), ()))


def _fused_kernel(x_ref, w_ref, b_ref, o_ref):
    # x_ref: (6, 64)   activations
    # w_ref: (2, 64, 64) stacked [W1, W2], each in torch (out, in) layout
    # b_ref: (2, 64)     stacked [b1, b2]
    x = x_ref[...]
    w1 = w_ref[0]
    w2 = w_ref[1]
    b = b_ref[...]
    b1 = b[0:1, :]            # (1, 64)
    b2 = b[1:2, :]            # (1, 64)

    # linear1: x @ W1^T + b1 (MXU, f32 accumulation, no materialized transpose)
    h = lax.dot_general(x, w1, dimension_numbers=_DN,
                        preferred_element_type=jnp.float32) + b1

    # BatchNorm1d(64), training-mode batch statistics over the batch axis.
    # gamma=1, beta=0 (torch default init), biased variance (divide by N).
    mu = jnp.mean(h, axis=0, keepdims=True)
    diff = h - mu
    var = jnp.mean(diff * diff, axis=0, keepdims=True)
    hn = diff * lax.rsqrt(var + BN_EPS)

    # linear2: hn @ W2^T + b2
    y = lax.dot_general(hn, w2, dimension_numbers=_DN,
                        preferred_element_type=jnp.float32) + b2

    # TODO(synk): output left at (6,64) (masked store); padding to a lane-dense
    # (8,128) block is a micro-win not worth the extra wrapper slice here.
    o_ref[...] = y


_VMEM_SPEC = pl.BlockSpec(memory_space=pltpu.MemorySpace.VMEM)

_fused_call = pl.pallas_call(
    _fused_kernel,
    out_shape=jax.ShapeDtypeStruct((N_ROWS, FEAT), jnp.float32),
    in_specs=[_VMEM_SPEC, _VMEM_SPEC, _VMEM_SPEC],
    out_specs=_VMEM_SPEC,
)


@jax.jit
def model_forward(x1, x2, x3, w_stack, b_stack):
    # Glue (plain JAX, fused in the same jit as the kernel):
    # torch.cat([x1, x2, x3], dim=2).view(1, 6, 64)
    v1 = jnp.concatenate([x1, x2, x3], axis=2)
    x = v1.reshape(N_ROWS, FEAT).astype(jnp.float32)

    out = _fused_call(x, w_stack, b_stack)

    # torch: .view(-1, 1, 64, 1)
    return out.reshape(-1, 1, FEAT, 1)


if __name__ == "__main__":
    key = jax.random.PRNGKey(0)
    k1, k2, k3, kw1, kb1, kw2, kb2 = jax.random.split(key, 7)

    # Inputs: three tensors concatenated on dim=2 whose total element count is
    # 6 * 64 = 384  ->  (2, 4, 16) each.
    x1 = jax.random.normal(k1, (2, 4, 16), jnp.float32)
    x2 = jax.random.normal(k2, (2, 4, 16), jnp.float32)
    x3 = jax.random.normal(k3, (2, 4, 16), jnp.float32)

    # Deterministic parameter init (synthetic, no checkpoint), packed once.
    w1 = jax.random.normal(kw1, (FEAT, FEAT), jnp.float32) * 0.05
    b1 = jax.random.normal(kb1, (FEAT,), jnp.float32) * 0.05
    w2 = jax.random.normal(kw2, (FEAT, FEAT), jnp.float32) * 0.05
    b2 = jax.random.normal(kb2, (FEAT,), jnp.float32) * 0.05
    w_stack = jnp.stack([w1, w2])   # (2, 64, 64)
    b_stack = jnp.stack([b1, b2])   # (2, 64)

    out = model_forward(x1, x2, x3, w_stack, b_stack)
    jax.block_until_ready(out)
    assert out.shape == (N_ROWS, 1, FEAT, 1), out.shape
    print("KERNEL_OK")
</pallas_src>

<mosaic_0001>
module attributes {stable_mosaic.version = 11 : i64} {
  func.func @_fused_kernel(%arg0: memref<6x64xf32, #tpu.memory_space<vmem>>, %arg1: memref<2x64x64xf32, #tpu.memory_space<vmem>>, %arg2: memref<2x64xf32, #tpu.memory_space<vmem>>, %arg3: memref<6x64xf32, #tpu.memory_space<vmem>>) attributes {dimension_semantics = [], scalar_prefetch = 0 : i64, scratch_operands = 0 : i64, tpu.core_type = #tpu.core_type<tc>} {
    %c0 = arith.constant 0 : index
    %c0_0 = arith.constant 0 : index
    %0 = vector.load %arg0[%c0, %c0_0] : memref<6x64xf32, #tpu.memory_space<vmem>>, vector<6x64xf32>
    %c0_1 = arith.constant 0 : index
    %c0_2 = arith.constant 0 : index
    %c0_3 = arith.constant 0 : index
    %1 = vector.load %arg1[%c0_1, %c0_2, %c0_3] : memref<2x64x64xf32, #tpu.memory_space<vmem>>, vector<1x64x64xf32>
    %2 = vector.shape_cast %1 : vector<1x64x64xf32> to vector<64x64xf32>
    %c1 = arith.constant 1 : index
    %c0_4 = arith.constant 0 : index
    %c0_5 = arith.constant 0 : index
    %3 = vector.load %arg1[%c1, %c0_4, %c0_5] : memref<2x64x64xf32, #tpu.memory_space<vmem>>, vector<1x64x64xf32>
    %4 = vector.shape_cast %3 : vector<1x64x64xf32> to vector<64x64xf32>
    %c0_6 = arith.constant 0 : index
    %c0_7 = arith.constant 0 : index
    %5 = vector.load %arg2[%c0_6, %c0_7] : memref<2x64xf32, #tpu.memory_space<vmem>>, vector<2x64xf32>
    %6 = vector.extract_strided_slice %5 {offsets = [0, 0], sizes = [1, 64], strides = [1, 1]} : vector<2x64xf32> to vector<1x64xf32>
    %7 = vector.extract_strided_slice %5 {offsets = [1, 0], sizes = [1, 64], strides = [1, 1]} : vector<2x64xf32> to vector<1x64xf32>
    %cst = arith.constant dense<0.000000e+00> : vector<6x64xf32>
    %8 = tpu.matmul %0, %2, %cst {dimension_numbers = #tpu.dot_dimension_numbers<[1], [1], [0], [0], [0, 0, 1, 0], [], []>} : vector<6x64xf32>, vector<64x64xf32>, vector<6x64xf32> -> vector<6x64xf32>
    %9 = vector.broadcast %6 : vector<1x64xf32> to vector<6x64xf32>
    %10 = arith.addf %8, %9 : vector<6x64xf32>
    %cst_8 = arith.constant dense<0.000000e+00> : vector<64xf32>
    %11 = vector.multi_reduction <add>, %10, %cst_8 [0] : vector<6x64xf32> to vector<64xf32>
    %12 = vector.shape_cast %11 : vector<64xf32> to vector<1x64xf32>
    %cst_9 = arith.constant 6.000000e+00 : f32
    %13 = vector.broadcast %cst_9 : f32 to vector<1x64xf32>
    %14 = arith.divf %12, %13 : vector<1x64xf32>
    %15 = vector.broadcast %14 : vector<1x64xf32> to vector<6x64xf32>
    %16 = arith.subf %10, %15 : vector<6x64xf32>
    %17 = arith.mulf %16, %16 : vector<6x64xf32>
    %cst_10 = arith.constant dense<0.000000e+00> : vector<64xf32>
    %18 = vector.multi_reduction <add>, %17, %cst_10 [0] : vector<6x64xf32> to vector<64xf32>
    %19 = vector.shape_cast %18 : vector<64xf32> to vector<1x64xf32>
    %cst_11 = arith.constant 6.000000e+00 : f32
    %20 = vector.broadcast %cst_11 : f32 to vector<1x64xf32>
    %21 = arith.divf %19, %20 : vector<1x64xf32>
    %cst_12 = arith.constant 9.99999974E-6 : f32
    %22 = vector.broadcast %cst_12 : f32 to vector<1x64xf32>
    %23 = arith.addf %21, %22 : vector<1x64xf32>
    %24 = math.rsqrt %23 : vector<1x64xf32>
    %25 = vector.broadcast %24 : vector<1x64xf32> to vector<6x64xf32>
    %26 = arith.mulf %16, %25 : vector<6x64xf32>
    %cst_13 = arith.constant dense<0.000000e+00> : vector<6x64xf32>
    %27 = tpu.matmul %26, %4, %cst_13 {dimension_numbers = #tpu.dot_dimension_numbers<[1], [1], [0], [0], [0, 0, 1, 0], [], []>} : vector<6x64xf32>, vector<64x64xf32>, vector<6x64xf32> -> vector<6x64xf32>
    %28 = vector.broadcast %7 : vector<1x64xf32> to vector<6x64xf32>
    %29 = arith.addf %27, %28 : vector<6x64xf32>
    %c0_14 = arith.constant 0 : index
    %c0_15 = arith.constant 0 : index
    %30 = vector.load %arg3[%c0_14, %c0_15] : memref<6x64xf32, #tpu.memory_space<vmem>>, vector<6x64xf32>
    tpu.vector_store %arg3[%c0_14, %c0_15], %29 {strides = array<i32>} : memref<6x64xf32, #tpu.memory_space<vmem>>, vector<6x64xf32>,
    return
  }
}

</mosaic_0001>

<llo_original>
// kernel: model_forward.1
$region0: #{model_forward.1}
  #allocation0 [shape = 'u32[]', space=smem, size = 0x4, offset = 0x4, fixed_abs, tag = 'smem constant byte address 0x4 - core index']
  #allocation1 [shape = 'u32[144,128]{1,0:T(1,128)}', space=vmem, size = 0x12000, scoped, tag = 'internal scratch']
  %s0 = inlined_call_operand.vmem [shape: f32[6,64], index: 0, kind: input, shape index: {}]
  %s1 = inlined_call_operand.hbm [shape: f32[2,64,64], index: 1, kind: input, shape index: {}]
  %s2 = inlined_call_operand.vmem [shape: f32[2,64], index: 2, kind: input, shape index: {}]
  %s3 = inlined_call_operand.vmem [shape: f32[6,64], index: 3, kind: output, shape index: {}]
  %s4 = sld [smem:[#allocation0]]
  $region26: #{model_forward.1} parent=0
    _
  %s6 = ssub.s32 1, %s4
  %s7 = scalar_select 0, %s6, %s4
  $region1: #{model_forward.1} parent=0
    #allocation2 [shape = 'u8[65536]{0}', space=vmem, size = 0x10000, scoped, tag = 'input window, operand 1, single buffered']
    #allocation3 [shape = 's32[1]{0}', space=sflag, size = 0x4, scoped, tag = 'scoped memory for model_forward.1']
    %8 = vsyncpa [#allocation3], 0
    // Predicated region
    $region2: #{model_forward.1} parent=1 // pred_check
      _
    $region3: #{model_forward.1} parent=1 // pred_check_branch
      %10 = sbr.rel (0) target = $region5
    $region4: #{model_forward.1} parent=1 // pred_region
      _
    $region5: #{model_forward.1} parent=1 // pred_fallthru
      _
    // Predicated region
    $region6: #{model_forward.1} parent=1 // pred_check
      _
    $region7: #{model_forward.1} parent=1 // pred_check_branch
      %12 = sbr.rel (0) target = $region9
    $region8: #{model_forward.1} parent=1 // pred_region
      %s14 = ssub.s32 2048, 2048
      %15 = vsyncadd [#allocation3], %s14
      %s16 = sshll.u32 [#allocation2], 4
      %s17 = int_to_ptr.vmem [resolvable:$true] %s16
      %22 = dma.hbm_to_vmem [thread:$0]  %s1, 2048, %s17, [#allocation3], 128, 128, 8
    $region9: #{model_forward.1} parent=1 // pred_fallthru
      _
    // Predicated region
    $region10: #{model_forward.1} parent=1 // pred_check
      _
    $region11: #{model_forward.1} parent=1 // pred_check_branch
      %24 = sbr.rel (0) target = $region13
    $region12: #{model_forward.1} parent=1 // pred_region
      _
    $region13: #{model_forward.1} parent=1 // pred_fallthru
      _
    // Predicated region
    $region14: #{model_forward.1} parent=1 // pred_check
      _
    $region15: #{model_forward.1} parent=1 // pred_check_branch
      %26 = sbr.rel (0) target = $region17
    $region16: #{model_forward.1} parent=1 // pred_region
      %27 = dma.done [#allocation3], 2048
    $region17: #{model_forward.1} parent=1 // pred_fallthru
      _
    %v28 = vld [vmem:[%s0] sm:$0x3f]
    %v29 = vld [vmem:[#allocation2] sm:$0xff]
    %v30 = vld [vmem:[#allocation2 + $0x8] sm:$0xff]
    %v31 = vld [vmem:[#allocation2 + $0x10] sm:$0xff]
    %v32 = vld [vmem:[#allocation2 + $0x18] sm:$0xff]
    %v33 = vld [vmem:[#allocation2 + $0x20] sm:$0xff]
    %v34 = vld [vmem:[#allocation2 + $0x28] sm:$0xff]
    %v35 = vld [vmem:[#allocation2 + $0x30] sm:$0xff]
    %v36 = vld [vmem:[#allocation2 + $0x38] sm:$0xff]
    %s37 = scalar_lea.vmem [#allocation2], 64
    %v38 = vld [vmem:[%s37] sm:$0xff]
    %v39 = vld [vmem:[%s37 + $0x8] sm:$0xff]
    %v40 = vld [vmem:[%s37 + $0x10] sm:$0xff]
    %v41 = vld [vmem:[%s37 + $0x18] sm:$0xff]
    %v42 = vld [vmem:[%s37 + $0x20] sm:$0xff]
    %v43 = vld [vmem:[%s37 + $0x28] sm:$0xff]
    %v44 = vld [vmem:[%s37 + $0x30] sm:$0xff]
    %v45 = vld [vmem:[%s37 + $0x38] sm:$0xff]
    %v46 = vld [vmem:[%s2] sm:$0x3]
    %v47 = vlaneseq
    %v48 = vshrl.u32 %v47, 7
    %v49 = vsub.s32 0, %v48
    %v50 = vrot.slane %v46, %v49
    %vm51 = vcmask 523264
    %v53 = vsel %vm51, %v28, 0
    %v56 = vsel %vm51, %v29, 0
    %v59 = vsel %vm51, %v30, 0
    %v62 = vsel %vm51, %v31, 0
    %v65 = vsel %vm51, %v32, 0
    %v68 = vsel %vm51, %v33, 0
    %v71 = vsel %vm51, %v34, 0
    %v74 = vsel %vm51, %v35, 0
    %v77 = vsel %vm51, %v36, 0
    %79 = vmatprep.subr.mxu0 0.0
    %80 = vmatpush1.xpose.msra.mxu0 %v56
    %81 = vmatprep.subr.mxu0 0.0
    %82 = vmatpush1.xpose.msra.mxu0 %v59
    %83 = vmatprep.subr.mxu0 0.0
    %84 = vmatpush1.xpose.msra.mxu0 %v62
    %85 = vmatprep.subr.mxu0 0.0
    %86 = vmatpush1.xpose.msra.mxu0 %v65
    %87 = vmatprep.subr.mxu0 0.0
    %88 = vmatpush1.xpose.msra.mxu0 %v68
    %89 = vmatprep.subr.mxu0 0.0
    %90 = vmatpush1.xpose.msra.mxu0 %v71
    %91 = vmatprep.subr.mxu0 0.0
    %92 = vmatpush1.xpose.msra.mxu0 %v74
    %93 = vmatprep.subr.mxu0 0.0
    %94 = vmatpush1.xpose.msra.mxu0 %v77
    %95 = vmatprep.subr.mxu0 0.0
    %96 = vmatpush1.xpose.msra.mxu0 0.0
    %97 = vmatprep.subr.mxu0 0.0
    %98 = vmatpush1.xpose.msra.mxu0 0.0
    %99 = vmatprep.subr.mxu0 0.0
    %100 = vmatpush1.xpose.msra.mxu0 0.0
    %101 = vmatprep.subr.mxu0 0.0
    %102 = vmatpush1.xpose.msra.mxu0 0.0
    %103 = vmatprep.subr.mxu0 0.0
    %104 = vmatpush1.xpose.msra.mxu0 0.0
    %105 = vmatprep.subr.mxu0 0.0
    %106 = vmatpush1.xpose.msra.mxu0 0.0
    %107 = vmatprep.subr.mxu0 0.0
    %108 = vmatpush1.xpose.msra.mxu0 0.0
    %109 = vmatprep.subr.mxu0 0.0
    %110 = vmatpush1.xpose.msra.mxu0 0.0
    %111 = vmatprep.subr.mxu0 0.0
    %112 = vmatpush1.xpose.msra.mxu0 0.0
    %113 = vmatprep.subr.mxu0 0.0
    %114 = vmatpush1.xpose.msra.mxu0 0.0
    %115 = vmatprep.subr.mxu0 0.0
    %116 = vmatpush1.xpose.msra.mxu0 0.0
    %117 = vmatprep.subr.mxu0 0.0
    %118 = vmatpush1.xpose.msra.mxu0 0.0
    %119 = vmatprep.subr.mxu0 0.0
    %120 = vmatpush1.xpose.msra.mxu0 0.0
    %121 = vmatprep.subr.mxu0 0.0
    %122 = vmatpush1.xpose.msra.mxu0 0.0
    %123 = vmatprep.subr.mxu0 0.0
    %124 = vmatpush1.xpose.msra.mxu0 0.0
    %125 = vmatprep.subr.mxu0 0.0
    %126 = vmatpush1.xpose.msra.mxu0 0.0
    %127 = vmatprep.subr.mxu0 0.0
    %128 = vmatpush1.xpose.msra.mxu0 0.0
    %129 = vmatprep.subr.mxu0 0.0
    %130 = vmatpush1.xpose.msra.mxu0 0.0
    %131 = vmatprep.subr.mxu0 0.0
    %132 = vmatpush1.xpose.msra.mxu0 0.0
    %133 = vmatprep.subr.mxu0 0.0
    %134 = vmatpush1.xpose.msra.mxu0 0.0
    %135 = vmatprep.subr.mxu0 0.0
    %136 = vmatpush1.xpose.msra.mxu0 0.0
    %137 = vmatprep.subr.mxu0 0.0
    %138 = vmatpush1.xpose.msra.mxu0 0.0
    %139 = vmatprep.subr.mxu0 0.0
    %140 = vmatpush1.xpose.msra.mxu0 0.0
    %141 = vmatprep.subr.mxu0 0.0
    %142 = vmatpush1.xpose.msra.mxu0 0.0
    %143 = vmatprep.mubr.f32.mxu0 0.0
    %144 = vmatmul.mubr.f32.gmra.mrb[0].mxu0 %v53
    %v145 = vpop.f32.mrb[0].mxu0
    %v146 = vadd.f32 %v50, %v145
    %v147 = vpop.f32.mrb[0].mxu0
    %148 = vdwg.mxu0
    %vm149 = vcmask 521216
    %v150 = vsel %vm149, %v146, 0.0
    %v151 = vrot.slane %v150, 4
    %v152 = vadd.f32 %v150, %v151
    %v153 = vrot.slane %v152, 2
    %v154 = vadd.f32 %v152, %v153
    %v155 = vrot.slane %v154, 1
    %v156 = vadd.f32 %v154, %v155
    %v157 = vrcp.pop 6.0
    %v158 = vmul.f32 %v156, %v157
    %v159 = vsub.f32 %v146, %v158
    %v160 = vmul.f32 %v159, %v159
    %v161 = vsel %vm149, %v160, 0.0
    %v162 = vrot.slane %v161, 4
    %v163 = vadd.f32 %v161, %v162
    %v164 = vrot.slane %v163, 2
    %v165 = vadd.f32 %v163, %v164
    %v166 = vrot.slane %v165, 1
    %v167 = vadd.f32 %v165, %v166
    %v168 = vmul.f32 %v167, %v157
    %v169 = vadd.f32 %v168, 1e-05
    %v170 = vrsqrt.pop %v169
    %v171 = vmul.f32 %v159, %v170
    %v172 = vlaneseq
    %v173 = vshrl.u32 %v172, 7
    %v174 = vsub.s32 1, %v173
    %v175 = vrot.slane %v46, %v174
    %v177 = vsel %vm51, %v171, 0
    %v180 = vsel %vm51, %v38, 0
    %v183 = vsel %vm51, %v39, 0
    %v186 = vsel %vm51, %v40, 0
    %v189 = vsel %vm51, %v41, 0
    %v192 = vsel %vm51, %v42, 0
    %v195 = vsel %vm51, %v43, 0
    %v198 = vsel %vm51, %v44, 0
    %v201 = vsel %vm51, %v45, 0
    %203 = vmatprep.subr.mxu0 0.0
    %204 = vmatpush1.xpose.msra.mxu0 %v180
    %205 = vmatprep.subr.mxu0 0.0
    %206 = vmatpush1.xpose.msra.mxu0 %v183
    %207 = vmatprep.subr.mxu0 0.0
    %208 = vmatpush1.xpose.msra.mxu0 %v186
    %209 = vmatprep.subr.mxu0 0.0
    %210 = vmatpush1.xpose.msra.mxu0 %v189
    %211 = vmatprep.subr.mxu0 0.0
    %212 = vmatpush1.xpose.msra.mxu0 %v192
    %213 = vmatprep.subr.mxu0 0.0
    %214 = vmatpush1.xpose.msra.mxu0 %v195
    %215 = vmatprep.subr.mxu0 0.0
    %216 = vmatpush1.xpose.msra.mxu0 %v198
    %217 = vmatprep.subr.mxu0 0.0
    %218 = vmatpush1.xpose.msra.mxu0 %v201
    %219 = vmatprep.subr.mxu0 0.0
    %220 = vmatpush1.xpose.msra.mxu0 0.0
    %221 = vmatprep.subr.mxu0 0.0
    %222 = vmatpush1.xpose.msra.mxu0 0.0
    %223 = vmatprep.subr.mxu0 0.0
    %224 = vmatpush1.xpose.msra.mxu0 0.0
    %225 = vmatprep.subr.mxu0 0.0
    %226 = vmatpush1.xpose.msra.mxu0 0.0
    %227 = vmatprep.subr.mxu0 0.0
    %228 = vmatpush1.xpose.msra.mxu0 0.0
    %229 = vmatprep.subr.mxu0 0.0
    %230 = vmatpush1.xpose.msra.mxu0 0.0
    %231 = vmatprep.subr.mxu0 0.0
    %232 = vmatpush1.xpose.msra.mxu0 0.0
    %233 = vmatprep.subr.mxu0 0.0
    %234 = vmatpush1.xpose.msra.mxu0 0.0
    %235 = vmatprep.subr.mxu0 0.0
    %236 = vmatpush1.xpose.msra.mxu0 0.0
    %237 = vmatprep.subr.mxu0 0.0
    %238 = vmatpush1.xpose.msra.mxu0 0.0
    %239 = vmatprep.subr.mxu0 0.0
    %240 = vmatpush1.xpose.msra.mxu0 0.0
    %241 = vmatprep.subr.mxu0 0.0
    %242 = vmatpush1.xpose.msra.mxu0 0.0
    %243 = vmatprep.subr.mxu0 0.0
    %244 = vmatpush1.xpose.msra.mxu0 0.0
    %245 = vmatprep.subr.mxu0 0.0
    %246 = vmatpush1.xpose.msra.mxu0 0.0
    %247 = vmatprep.subr.mxu0 0.0
    %248 = vmatpush1.xpose.msra.mxu0 0.0
    %249 = vmatprep.subr.mxu0 0.0
    %250 = vmatpush1.xpose.msra.mxu0 0.0
    %251 = vmatprep.subr.mxu0 0.0
    %252 = vmatpush1.xpose.msra.mxu0 0.0
    %253 = vmatprep.subr.mxu0 0.0
    %254 = vmatpush1.xpose.msra.mxu0 0.0
    %255 = vmatprep.subr.mxu0 0.0
    %256 = vmatpush1.xpose.msra.mxu0 0.0
    %257 = vmatprep.subr.mxu0 0.0
    %258 = vmatpush1.xpose.msra.mxu0 0.0
    %259 = vmatprep.subr.mxu0 0.0
    %260 = vmatpush1.xpose.msra.mxu0 0.0
    %261 = vmatprep.subr.mxu0 0.0
    %262 = vmatpush1.xpose.msra.mxu0 0.0
    %263 = vmatprep.subr.mxu0 0.0
    %264 = vmatpush1.xpose.msra.mxu0 0.0
    %265 = vmatprep.subr.mxu0 0.0
    %266 = vmatpush1.xpose.msra.mxu0 0.0
    %267 = vmatprep.mubr.f32.mxu0 0.0
    %268 = vmatmul.mubr.f32.gmra.mrb[0].mxu0 %v177
    %v269 = vpop.f32.mrb[0].mxu0
    %v270 = vadd.f32 %v175, %v269
    %v271 = vpop.f32.mrb[0].mxu0
    %272 = vdwg.mxu0
    %273 = vst.msk [vmem:[%s3] sm:$0x3f] %vm149, %v270
    // Predicated region
    $region18: #{model_forward.1} parent=1 // pred_check
      _
    $region19: #{model_forward.1} parent=1 // pred_check_branch
      %275 = sbr.rel (0) target = $region21
    $region20: #{model_forward.1} parent=1 // pred_region
      _
    $region21: #{model_forward.1} parent=1 // pred_fallthru
      _
    // Predicated region
    $region22: #{model_forward.1} parent=1 // pred_check
      _
    $region23: #{model_forward.1} parent=1 // pred_check_branch
      %277 = sbr.rel (0) target = $region25
    $region24: #{model_forward.1} parent=1 // pred_region
      _
    $region25: #{model_forward.1} parent=1 // pred_fallthru
      _
    %278 = vsyncpa [#allocation3], 1

</llo_original>
